<compile_context>
chip_gen: v5e
topology: v5e:2x2
jax: 0.10.0
libtpu: 0.0.40
codegen_flags: <defaults>
</compile_context>

<pallas_src>
import functools

import jax
import jax.numpy as jnp
import numpy as np
from jax.experimental import pallas as pl
from jax.experimental.pallas import tpu as pltpu

# Tap order (kh, kw) -> (dh, dw); must match the host-side im2col weight reshape.
_TAP_OFFSETS = tuple((dh, dw) for dh in (-1, 0, 1) for dw in (-1, 0, 1))


def _bottleneck_kernel(x_ref, w1_ref, b1_ref, w2_ref, b2_ref, w3a_ref, b3a_ref,
                       mask_ref, o_ref, *, img_w):
    # x_ref   : (1, Cin, H*W)       one batch element, channel-major, lane-dense spatial
    # w1/w2   : (Cin, 9*Cin)        im2col conv weights
    # w3a_ref : (Cout, 9*Cin+Cin)   conv3 (BN folded) with the 1x1 skip weight hstacked on
    # bK_ref  : (CoK, 1)            (b3a already holds b3*bn_scale + bn_shift + b_skip)
    # mask_ref: (9, H*W)            border-validity masks per tap (also cover roll wrap)
    # o_ref   : (1, Cout, H*W)
    HW = x_ref.shape[2]

    def tap_rows(inner):
        # 9 shifted+masked copies of `inner`, tap-major, each (Ci, HW).
        # result[p] must equal inner[p + dh*W + dw] (zero when the 2D neighbor is outside
        # the image).  A circular roll by (-delta) mod HW followed by the border mask is
        # bit-identical: every wrapped lane is a masked lane.
        rows = []
        for t, (dh, dw) in enumerate(_TAP_OFFSETS):
            delta = dh * img_w + dw                      # static flat offset of this tap
            if delta == 0:
                rows.append(inner)                       # center tap: mask is all-ones
            else:
                shifted = pltpu.roll(inner, shift=(-delta) % HW, axis=1)
                rows.append(shifted * mask_ref[t:t + 1, :])
        return rows

    x = x_ref[0]                                         # (Cin, HW)

    # conv1 + ReLU
    p = jnp.concatenate(tap_rows(x), axis=0)             # (9*Cin, HW)
    h = jnp.maximum(
        jnp.dot(w1_ref[...], p, preferred_element_type=jnp.float32) + b1_ref[...], 0.0)

    # conv2 + ReLU
    p = jnp.concatenate(tap_rows(h), axis=0)             # (9*Cin, HW)
    h = jnp.maximum(
        jnp.dot(w2_ref[...], p, preferred_element_type=jnp.float32) + b2_ref[...], 0.0)

    # conv3 (+ folded BN) with the 1x1 skip fused in: x rides along as Cin extra K rows.
    p = jnp.concatenate(tap_rows(h) + [x], axis=0)       # (9*Cin + Cin, HW)
    out = jnp.dot(w3a_ref[...], p, preferred_element_type=jnp.float32) + b3a_ref[...]
    # Dropout(0.1): identity in eval mode.

    o_ref[0] = jnp.maximum(out, 0.0)                     # residual add fused above; ReLU


def _build_tap_masks(H, W):
    """(9, H*W) float32: mask[t, h*W+w] = 1 iff (h+dh, w+dw) is inside the image."""
    hh, ww = np.meshgrid(np.arange(H), np.arange(W), indexing="ij")
    rows = []
    for dh, dw in _TAP_OFFSETS:
        valid = ((hh + dh >= 0) & (hh + dh < H) &
                 (ww + dw >= 0) & (ww + dw < W))
        rows.append(valid.reshape(-1).astype(np.float32))
    return jnp.asarray(np.stack(rows, axis=0))


def prepare_params(w1, b1, w2, b2, w3, b3, gamma, beta, running_mean,
                   running_var, eps, w_skip, b_skip, H, W):
    """PyTorch-layout params (OIHW convs, per-channel BN) -> kernel operands."""
    def im2col_weight(w_oihw):
        co, ci, kh, kw = w_oihw.shape
        # column order = (kh, kw, ci), matching _TAP_OFFSETS x channel in the kernel
        return jnp.transpose(w_oihw, (0, 2, 3, 1)).reshape(co, kh * kw * ci)

    # Fold eval-mode BatchNorm into conv3 (conv then affine BN is linear).
    bn_scale = gamma / jnp.sqrt(running_var + eps)
    bn_shift = beta - running_mean * bn_scale
    w3_mat = im2col_weight(w3) * bn_scale[:, None]
    b3_col = (b3 * bn_scale + bn_shift)[:, None]

    # Fuse the 1x1 skip conv into conv3's matmul: extra K columns + merged bias.
    w3_aug = jnp.concatenate([w3_mat, w_skip[:, :, 0, 0]], axis=1)  # (Cout, 9*Cin + Cin)
    b3_aug = b3_col + b_skip[:, None]

    return (im2col_weight(w1), b1[:, None],
            im2col_weight(w2), b2[:, None],
            w3_aug, b3_aug,
            _build_tap_masks(H, W))


def resnet_bottleneck(x_nchw, params):
    """x_nchw: (N, Cin, H, W) float32 -> (N, Cout, H, W) float32."""
    N, Cin, H, W = x_nchw.shape
    (w1, b1, w2, b2, w3a, b3a, masks) = params
    Cout = w3a.shape[0]
    HW = H * W

    x_flat = x_nchw.reshape(N, Cin, HW)        # free reshape, stays NCHW-major

    def full_spec(arr):
        return pl.BlockSpec(arr.shape, lambda n: (0,) * arr.ndim)

    out_flat = pl.pallas_call(
        functools.partial(_bottleneck_kernel, img_w=W),
        out_shape=jax.ShapeDtypeStruct((N, Cout, HW), jnp.float32),
        grid=(N,),
        in_specs=[
            pl.BlockSpec((1, Cin, HW), lambda n: (n, 0, 0)),   # x (per-image block)
            full_spec(w1), full_spec(b1),
            full_spec(w2), full_spec(b2),
            full_spec(w3a), full_spec(b3a),
            full_spec(masks),
        ],
        out_specs=pl.BlockSpec((1, Cout, HW), lambda n: (n, 0, 0)),
        compiler_params=pltpu.CompilerParams(
            dimension_semantics=("parallel",)),
    )(x_flat, w1, b1, w2, b2, w3a, b3a, masks)

    return out_flat.reshape(N, Cout, H, W)


def reference(x, w1, b1, w2, b2, w3, b3, gamma, beta, rmean, rvar, eps,
              w_skip, b_skip):
    """Pure-JAX NCHW reference (eval-mode BN, dropout identity)."""
    def conv(inp, w, b, pad):
        y = jax.lax.conv_general_dilated(
            inp, w, window_strides=(1, 1), padding=((pad, pad), (pad, pad)),
            dimension_numbers=("NCHW", "OIHW", "NCHW"))
        return y + b[None, :, None, None]

    h = jax.nn.relu(conv(x, w1, b1, 1))
    h = jax.nn.relu(conv(h, w2, b2, 1))
    h = conv(h, w3, b3, 1)
    inv = gamma / jnp.sqrt(rvar + eps)
    h = (h - rmean[None, :, None, None]) * inv[None, :, None, None] \
        + beta[None, :, None, None]
    skip = conv(x, w_skip, b_skip, 0)
    return jax.nn.relu(h + skip)


if __name__ == "__main__":
    # NCHW input (2, 4, 16, 16); in_channels=4, out_channels=8.
    N, Cin, H, W = 2, 4, 16, 16
    Cout = 8

    key = jax.random.PRNGKey(0)
    ks = jax.random.split(key, 14)

    x = jax.random.normal(ks[0], (N, Cin, H, W), jnp.float32)

    # PyTorch-style parameter layouts (OIHW conv weights, per-channel vectors).
    w1 = 0.1 * jax.random.normal(ks[1], (Cin, Cin, 3, 3), jnp.float32)
    b1 = 0.1 * jax.random.normal(ks[2], (Cin,), jnp.float32)
    w2 = 0.1 * jax.random.normal(ks[3], (Cin, Cin, 3, 3), jnp.float32)
    b2 = 0.1 * jax.random.normal(ks[4], (Cin,), jnp.float32)
    w3 = 0.1 * jax.random.normal(ks[5], (Cout, Cin, 3, 3), jnp.float32)
    b3 = 0.1 * jax.random.normal(ks[6], (Cout,), jnp.float32)
    w_skip = 0.1 * jax.random.normal(ks[7], (Cout, Cin, 1, 1), jnp.float32)
    b_skip = 0.1 * jax.random.normal(ks[8], (Cout,), jnp.float32)

    # BatchNorm2d(Cout) inference-mode parameters.
    gamma = 1.0 + 0.1 * jax.random.normal(ks[9], (Cout,), jnp.float32)
    beta = 0.1 * jax.random.normal(ks[10], (Cout,), jnp.float32)
    rmean = 0.1 * jax.random.normal(ks[11], (Cout,), jnp.float32)
    rvar = 1.0 + 0.1 * jax.random.uniform(ks[12], (Cout,), jnp.float32)
    eps = 1e-5

    params = prepare_params(w1, b1, w2, b2, w3, b3, gamma, beta, rmean, rvar,
                            eps, w_skip, b_skip, H, W)

    out = resnet_bottleneck(x, params)
    jax.block_until_ready(out)

    ref = reference(x, w1, b1, w2, b2, w3, b3, gamma, beta, rmean, rvar, eps,
                    w_skip, b_skip)
    err = float(jnp.max(jnp.abs(out - ref)))
    assert out.shape == (N, Cout, H, W)
    assert err < 1e-4, f"mismatch vs reference: {err}"

    print("KERNEL_OK")
</pallas_src>

<mosaic_0001>
module attributes {stable_mosaic.version = 11 : i64} {
  func.func @_bottleneck_kernel(%arg0: i32, %arg1: memref<1x4x256xf32, #tpu.memory_space<vmem>>, %arg2: memref<4x36xf32, #tpu.memory_space<vmem>>, %arg3: memref<4x1xf32, #tpu.memory_space<vmem>>, %arg4: memref<4x36xf32, #tpu.memory_space<vmem>>, %arg5: memref<4x1xf32, #tpu.memory_space<vmem>>, %arg6: memref<8x40xf32, #tpu.memory_space<vmem>>, %arg7: memref<8x1xf32, #tpu.memory_space<vmem>>, %arg8: memref<9x256xf32, #tpu.memory_space<vmem>>, %arg9: memref<1x8x256xf32, #tpu.memory_space<vmem>>) attributes {dimension_semantics = [#tpu.dimension_semantics<parallel>], iteration_bounds = array<i64: 2>, scalar_prefetch = 0 : i64, scratch_operands = 0 : i64, tpu.core_type = #tpu.core_type<tc>, window_params = [{transform_indices = @transform_0, window_bounds = array<i64: 1, 4, 256>}, {pipeline_mode = #tpu.pipeline_mode<synchronous>, transform_indices = @transform_1, window_bounds = array<i64: 4, 36>}, {pipeline_mode = #tpu.pipeline_mode<synchronous>, transform_indices = @transform_2, window_bounds = array<i64: 4, 1>}, {pipeline_mode = #tpu.pipeline_mode<synchronous>, transform_indices = @transform_3, window_bounds = array<i64: 4, 36>}, {pipeline_mode = #tpu.pipeline_mode<synchronous>, transform_indices = @transform_4, window_bounds = array<i64: 4, 1>}, {pipeline_mode = #tpu.pipeline_mode<synchronous>, transform_indices = @transform_5, window_bounds = array<i64: 8, 40>}, {pipeline_mode = #tpu.pipeline_mode<synchronous>, transform_indices = @transform_6, window_bounds = array<i64: 8, 1>}, {pipeline_mode = #tpu.pipeline_mode<synchronous>, transform_indices = @transform_7, window_bounds = array<i64: 9, 256>}, {transform_indices = @transform_8, window_bounds = array<i64: 1, 8, 256>}]} {
    %c0 = arith.constant 0 : index
    %c0_0 = arith.constant 0 : index
    %c0_1 = arith.constant 0 : index
    %0 = vector.load %arg1[%c0, %c0_0, %c0_1] : memref<1x4x256xf32, #tpu.memory_space<vmem>>, vector<1x4x256xf32>
    %1 = vector.shape_cast %0 : vector<1x4x256xf32> to vector<4x256xf32>
    %c17_i32 = arith.constant 17 : i32
    %2 = tpu.dynamic_rotate %1 by %c17_i32 dim 1 : vector<4x256xf32>, i32 -> vector<4x256xf32>
    %c0_2 = arith.constant 0 : index
    %c0_3 = arith.constant 0 : index
    %3 = vector.load %arg8[%c0_2, %c0_3] : memref<9x256xf32, #tpu.memory_space<vmem>>, vector<1x256xf32>
    %4 = vector.broadcast %3 : vector<1x256xf32> to vector<4x256xf32>
    %5 = arith.mulf %2, %4 : vector<4x256xf32>
    %c16_i32 = arith.constant 16 : i32
    %6 = tpu.dynamic_rotate %1 by %c16_i32 dim 1 : vector<4x256xf32>, i32 -> vector<4x256xf32>
    %c1 = arith.constant 1 : index
    %c0_4 = arith.constant 0 : index
    %7 = vector.load %arg8[%c1, %c0_4] : memref<9x256xf32, #tpu.memory_space<vmem>>, vector<1x256xf32>
    %8 = vector.broadcast %7 : vector<1x256xf32> to vector<4x256xf32>
    %9 = arith.mulf %6, %8 : vector<4x256xf32>
    %c15_i32 = arith.constant 15 : i32
    %10 = tpu.dynamic_rotate %1 by %c15_i32 dim 1 : vector<4x256xf32>, i32 -> vector<4x256xf32>
    %c2 = arith.constant 2 : index
    %c0_5 = arith.constant 0 : index
    %11 = vector.load %arg8[%c2, %c0_5] : memref<9x256xf32, #tpu.memory_space<vmem>>, vector<1x256xf32>
    %12 = vector.broadcast %11 : vector<1x256xf32> to vector<4x256xf32>
    %13 = arith.mulf %10, %12 : vector<4x256xf32>
    %c1_i32 = arith.constant 1 : i32
    %14 = tpu.dynamic_rotate %1 by %c1_i32 dim 1 : vector<4x256xf32>, i32 -> vector<4x256xf32>
    %c3 = arith.constant 3 : index
    %c0_6 = arith.constant 0 : index
    %15 = vector.load %arg8[%c3, %c0_6] : memref<9x256xf32, #tpu.memory_space<vmem>>, vector<1x256xf32>
    %16 = vector.broadcast %15 : vector<1x256xf32> to vector<4x256xf32>
    %17 = arith.mulf %14, %16 : vector<4x256xf32>
    %c255_i32 = arith.constant 255 : i32
    %18 = tpu.dynamic_rotate %1 by %c255_i32 dim 1 : vector<4x256xf32>, i32 -> vector<4x256xf32>
    %c5 = arith.constant 5 : index
    %c0_7 = arith.constant 0 : index
    %19 = vector.load %arg8[%c5, %c0_7] : memref<9x256xf32, #tpu.memory_space<vmem>>, vector<1x256xf32>
    %20 = vector.broadcast %19 : vector<1x256xf32> to vector<4x256xf32>
    %21 = arith.mulf %18, %20 : vector<4x256xf32>
    %c241_i32 = arith.constant 241 : i32
    %22 = tpu.dynamic_rotate %1 by %c241_i32 dim 1 : vector<4x256xf32>, i32 -> vector<4x256xf32>
    %c6 = arith.constant 6 : index
    %c0_8 = arith.constant 0 : index
    %23 = vector.load %arg8[%c6, %c0_8] : memref<9x256xf32, #tpu.memory_space<vmem>>, vector<1x256xf32>
    %24 = vector.broadcast %23 : vector<1x256xf32> to vector<4x256xf32>
    %25 = arith.mulf %22, %24 : vector<4x256xf32>
    %c240_i32 = arith.constant 240 : i32
    %26 = tpu.dynamic_rotate %1 by %c240_i32 dim 1 : vector<4x256xf32>, i32 -> vector<4x256xf32>
    %c7 = arith.constant 7 : index
    %c0_9 = arith.constant 0 : index
    %27 = vector.load %arg8[%c7, %c0_9] : memref<9x256xf32, #tpu.memory_space<vmem>>, vector<1x256xf32>
    %28 = vector.broadcast %27 : vector<1x256xf32> to vector<4x256xf32>
    %29 = arith.mulf %26, %28 : vector<4x256xf32>
    %c239_i32 = arith.constant 239 : i32
    %30 = tpu.dynamic_rotate %1 by %c239_i32 dim 1 : vector<4x256xf32>, i32 -> vector<4x256xf32>
    %c8 = arith.constant 8 : index
    %c0_10 = arith.constant 0 : index
    %31 = vector.load %arg8[%c8, %c0_10] : memref<9x256xf32, #tpu.memory_space<vmem>>, vector<1x256xf32>
    %32 = vector.broadcast %31 : vector<1x256xf32> to vector<4x256xf32>
    %33 = arith.mulf %30, %32 : vector<4x256xf32>
    %34 = tpu.concatenate %5, %9, %13, %17, %1, %21, %25, %29, %33 in 0 : vector<4x256xf32>, vector<4x256xf32>, vector<4x256xf32>, vector<4x256xf32>, vector<4x256xf32>, vector<4x256xf32>, vector<4x256xf32>, vector<4x256xf32>, vector<4x256xf32> -> vector<36x256xf32>
    %c0_11 = arith.constant 0 : index
    %c0_12 = arith.constant 0 : index
    %35 = vector.load %arg2[%c0_11, %c0_12] : memref<4x36xf32, #tpu.memory_space<vmem>>, vector<4x36xf32>
    %cst = arith.constant dense<0.000000e+00> : vector<4x256xf32>
    %36 = tpu.matmul %35, %34, %cst {dimension_numbers = #tpu.dot_dimension_numbers<[1], [0], [0], [1], [0, 0, 1, 1], [], []>} : vector<4x36xf32>, vector<36x256xf32>, vector<4x256xf32> -> vector<4x256xf32>
    %c0_13 = arith.constant 0 : index
    %c0_14 = arith.constant 0 : index
    %37 = vector.load %arg3[%c0_13, %c0_14] : memref<4x1xf32, #tpu.memory_space<vmem>>, vector<4x1xf32>
    %38 = vector.broadcast %37 : vector<4x1xf32> to vector<4x256xf32>
    %39 = arith.addf %36, %38 : vector<4x256xf32>
    %cst_15 = arith.constant 0.000000e+00 : f32
    %40 = vector.broadcast %cst_15 : f32 to vector<4x256xf32>
    %41 = arith.maximumf %39, %40 : vector<4x256xf32>
    %c17_i32_16 = arith.constant 17 : i32
    %42 = tpu.dynamic_rotate %41 by %c17_i32_16 dim 1 : vector<4x256xf32>, i32 -> vector<4x256xf32>
    %c0_17 = arith.constant 0 : index
    %c0_18 = arith.constant 0 : index
    %43 = vector.load %arg8[%c0_17, %c0_18] : memref<9x256xf32, #tpu.memory_space<vmem>>, vector<1x256xf32>
    %44 = vector.broadcast %43 : vector<1x256xf32> to vector<4x256xf32>
    %45 = arith.mulf %42, %44 : vector<4x256xf32>
    %c16_i32_19 = arith.constant 16 : i32
    %46 = tpu.dynamic_rotate %41 by %c16_i32_19 dim 1 : vector<4x256xf32>, i32 -> vector<4x256xf32>
    %c1_20 = arith.constant 1 : index
    %c0_21 = arith.constant 0 : index
    %47 = vector.load %arg8[%c1_20, %c0_21] : memref<9x256xf32, #tpu.memory_space<vmem>>, vector<1x256xf32>
    %48 = vector.broadcast %47 : vector<1x256xf32> to vector<4x256xf32>
    %49 = arith.mulf %46, %48 : vector<4x256xf32>
    %c15_i32_22 = arith.constant 15 : i32
    %50 = tpu.dynamic_rotate %41 by %c15_i32_22 dim 1 : vector<4x256xf32>, i32 -> vector<4x256xf32>
    %c2_23 = arith.constant 2 : index
    %c0_24 = arith.constant 0 : index
    %51 = vector.load %arg8[%c2_23, %c0_24] : memref<9x256xf32, #tpu.memory_space<vmem>>, vector<1x256xf32>
    %52 = vector.broadcast %51 : vector<1x256xf32> to vector<4x256xf32>
    %53 = arith.mulf %50, %52 : vector<4x256xf32>
    %c1_i32_25 = arith.constant 1 : i32
    %54 = tpu.dynamic_rotate %41 by %c1_i32_25 dim 1 : vector<4x256xf32>, i32 -> vector<4x256xf32>
    %c3_26 = arith.constant 3 : index
    %c0_27 = arith.constant 0 : index
    %55 = vector.load %arg8[%c3_26, %c0_27] : memref<9x256xf32, #tpu.memory_space<vmem>>, vector<1x256xf32>
    %56 = vector.broadcast %55 : vector<1x256xf32> to vector<4x256xf32>
    %57 = arith.mulf %54, %56 : vector<4x256xf32>
    %c255_i32_28 = arith.constant 255 : i32
    %58 = tpu.dynamic_rotate %41 by %c255_i32_28 dim 1 : vector<4x256xf32>, i32 -> vector<4x256xf32>
    %c5_29 = arith.constant 5 : index
    %c0_30 = arith.constant 0 : index
    %59 = vector.load %arg8[%c5_29, %c0_30] : memref<9x256xf32, #tpu.memory_space<vmem>>, vector<1x256xf32>
    %60 = vector.broadcast %59 : vector<1x256xf32> to vector<4x256xf32>
    %61 = arith.mulf %58, %60 : vector<4x256xf32>
    %c241_i32_31 = arith.constant 241 : i32
    %62 = tpu.dynamic_rotate %41 by %c241_i32_31 dim 1 : vector<4x256xf32>, i32 -> vector<4x256xf32>
    %c6_32 = arith.constant 6 : index
    %c0_33 = arith.constant 0 : index
    %63 = vector.load %arg8[%c6_32, %c0_33] : memref<9x256xf32, #tpu.memory_space<vmem>>, vector<1x256xf32>
    %64 = vector.broadcast %63 : vector<1x256xf32> to vector<4x256xf32>
    %65 = arith.mulf %62, %64 : vector<4x256xf32>
    %c240_i32_34 = arith.constant 240 : i32
    %66 = tpu.dynamic_rotate %41 by %c240_i32_34 dim 1 : vector<4x256xf32>, i32 -> vector<4x256xf32>
    %c7_35 = arith.constant 7 : index
    %c0_36 = arith.constant 0 : index
    %67 = vector.load %arg8[%c7_35, %c0_36] : memref<9x256xf32, #tpu.memory_space<vmem>>, vector<1x256xf32>
    %68 = vector.broadcast %67 : vector<1x256xf32> to vector<4x256xf32>
    %69 = arith.mulf %66, %68 : vector<4x256xf32>
    %c239_i32_37 = arith.constant 239 : i32
    %70 = tpu.dynamic_rotate %41 by %c239_i32_37 dim 1 : vector<4x256xf32>, i32 -> vector<4x256xf32>
    %c8_38 = arith.constant 8 : index
    %c0_39 = arith.constant 0 : index
    %71 = vector.load %arg8[%c8_38, %c0_39] : memref<9x256xf32, #tpu.memory_space<vmem>>, vector<1x256xf32>
    %72 = vector.broadcast %71 : vector<1x256xf32> to vector<4x256xf32>
    %73 = arith.mulf %70, %72 : vector<4x256xf32>
    %74 = tpu.concatenate %45, %49, %53, %57, %41, %61, %65, %69, %73 in 0 : vector<4x256xf32>, vector<4x256xf32>, vector<4x256xf32>, vector<4x256xf32>, vector<4x256xf32>, vector<4x256xf32>, vector<4x256xf32>, vector<4x256xf32>, vector<4x256xf32> -> vector<36x256xf32>
    %c0_40 = arith.constant 0 : index
    %c0_41 = arith.constant 0 : index
    %75 = vector.load %arg4[%c0_40, %c0_41] : memref<4x36xf32, #tpu.memory_space<vmem>>, vector<4x36xf32>
    %cst_42 = arith.constant dense<0.000000e+00> : vector<4x256xf32>
    %76 = tpu.matmul %75, %74, %cst_42 {dimension_numbers = #tpu.dot_dimension_numbers<[1], [0], [0], [1], [0, 0, 1, 1], [], []>} : vector<4x36xf32>, vector<36x256xf32>, vector<4x256xf32> -> vector<4x256xf32>
    %c0_43 = arith.constant 0 : index
    %c0_44 = arith.constant 0 : index
    %77 = vector.load %arg5[%c0_43, %c0_44] : memref<4x1xf32, #tpu.memory_space<vmem>>, vector<4x1xf32>
    %78 = vector.broadcast %77 : vector<4x1xf32> to vector<4x256xf32>
    %79 = arith.addf %76, %78 : vector<4x256xf32>
    %cst_45 = arith.constant 0.000000e+00 : f32
    %80 = vector.broadcast %cst_45 : f32 to vector<4x256xf32>
    %81 = arith.maximumf %79, %80 : vector<4x256xf32>
    %c17_i32_46 = arith.constant 17 : i32
    %82 = tpu.dynamic_rotate %81 by %c17_i32_46 dim 1 : vector<4x256xf32>, i32 -> vector<4x256xf32>
    %c0_47 = arith.constant 0 : index
    %c0_48 = arith.constant 0 : index
    %83 = vector.load %arg8[%c0_47, %c0_48] : memref<9x256xf32, #tpu.memory_space<vmem>>, vector<1x256xf32>
    %84 = vector.broadcast %83 : vector<1x256xf32> to vector<4x256xf32>
    %85 = arith.mulf %82, %84 : vector<4x256xf32>
    %c16_i32_49 = arith.constant 16 : i32
    %86 = tpu.dynamic_rotate %81 by %c16_i32_49 dim 1 : vector<4x256xf32>, i32 -> vector<4x256xf32>
    %c1_50 = arith.constant 1 : index
    %c0_51 = arith.constant 0 : index
    %87 = vector.load %arg8[%c1_50, %c0_51] : memref<9x256xf32, #tpu.memory_space<vmem>>, vector<1x256xf32>
    %88 = vector.broadcast %87 : vector<1x256xf32> to vector<4x256xf32>
    %89 = arith.mulf %86, %88 : vector<4x256xf32>
    %c15_i32_52 = arith.constant 15 : i32
    %90 = tpu.dynamic_rotate %81 by %c15_i32_52 dim 1 : vector<4x256xf32>, i32 -> vector<4x256xf32>
    %c2_53 = arith.constant 2 : index
    %c0_54 = arith.constant 0 : index
    %91 = vector.load %arg8[%c2_53, %c0_54] : memref<9x256xf32, #tpu.memory_space<vmem>>, vector<1x256xf32>
    %92 = vector.broadcast %91 : vector<1x256xf32> to vector<4x256xf32>
    %93 = arith.mulf %90, %92 : vector<4x256xf32>
    %c1_i32_55 = arith.constant 1 : i32
    %94 = tpu.dynamic_rotate %81 by %c1_i32_55 dim 1 : vector<4x256xf32>, i32 -> vector<4x256xf32>
    %c3_56 = arith.constant 3 : index
    %c0_57 = arith.constant 0 : index
    %95 = vector.load %arg8[%c3_56, %c0_57] : memref<9x256xf32, #tpu.memory_space<vmem>>, vector<1x256xf32>
    %96 = vector.broadcast %95 : vector<1x256xf32> to vector<4x256xf32>
    %97 = arith.mulf %94, %96 : vector<4x256xf32>
    %c255_i32_58 = arith.constant 255 : i32
    %98 = tpu.dynamic_rotate %81 by %c255_i32_58 dim 1 : vector<4x256xf32>, i32 -> vector<4x256xf32>
    %c5_59 = arith.constant 5 : index
    %c0_60 = arith.constant 0 : index
    %99 = vector.load %arg8[%c5_59, %c0_60] : memref<9x256xf32, #tpu.memory_space<vmem>>, vector<1x256xf32>
    %100 = vector.broadcast %99 : vector<1x256xf32> to vector<4x256xf32>
    %101 = arith.mulf %98, %100 : vector<4x256xf32>
    %c241_i32_61 = arith.constant 241 : i32
    %102 = tpu.dynamic_rotate %81 by %c241_i32_61 dim 1 : vector<4x256xf32>, i32 -> vector<4x256xf32>
    %c6_62 = arith.constant 6 : index
    %c0_63 = arith.constant 0 : index
    %103 = vector.load %arg8[%c6_62, %c0_63] : memref<9x256xf32, #tpu.memory_space<vmem>>, vector<1x256xf32>
    %104 = vector.broadcast %103 : vector<1x256xf32> to vector<4x256xf32>
    %105 = arith.mulf %102, %104 : vector<4x256xf32>
    %c240_i32_64 = arith.constant 240 : i32
    %106 = tpu.dynamic_rotate %81 by %c240_i32_64 dim 1 : vector<4x256xf32>, i32 -> vector<4x256xf32>
    %c7_65 = arith.constant 7 : index
    %c0_66 = arith.constant 0 : index
    %107 = vector.load %arg8[%c7_65, %c0_66] : memref<9x256xf32, #tpu.memory_space<vmem>>, vector<1x256xf32>
    %108 = vector.broadcast %107 : vector<1x256xf32> to vector<4x256xf32>
    %109 = arith.mulf %106, %108 : vector<4x256xf32>
    %c239_i32_67 = arith.constant 239 : i32
    %110 = tpu.dynamic_rotate %81 by %c239_i32_67 dim 1 : vector<4x256xf32>, i32 -> vector<4x256xf32>
    %c8_68 = arith.constant 8 : index
    %c0_69 = arith.constant 0 : index
    %111 = vector.load %arg8[%c8_68, %c0_69] : memref<9x256xf32, #tpu.memory_space<vmem>>, vector<1x256xf32>
    %112 = vector.broadcast %111 : vector<1x256xf32> to vector<4x256xf32>
    %113 = arith.mulf %110, %112 : vector<4x256xf32>
    %114 = tpu.concatenate %85, %89, %93, %97, %81, %101, %105, %109, %113, %1 in 0 : vector<4x256xf32>, vector<4x256xf32>, vector<4x256xf32>, vector<4x256xf32>, vector<4x256xf32>, vector<4x256xf32>, vector<4x256xf32>, vector<4x256xf32>, vector<4x256xf32>, vector<4x256xf32> -> vector<40x256xf32>
    %c0_70 = arith.constant 0 : index
    %c0_71 = arith.constant 0 : index
    %115 = vector.load %arg6[%c0_70, %c0_71] : memref<8x40xf32, #tpu.memory_space<vmem>>, vector<8x40xf32>
    %cst_72 = arith.constant dense<0.000000e+00> : vector<8x256xf32>
    %116 = tpu.matmul %115, %114, %cst_72 {dimension_numbers = #tpu.dot_dimension_numbers<[1], [0], [0], [1], [0, 0, 1, 1], [], []>} : vector<8x40xf32>, vector<40x256xf32>, vector<8x256xf32> -> vector<8x256xf32>
    %c0_73 = arith.constant 0 : index
    %c0_74 = arith.constant 0 : index
    %117 = vector.load %arg7[%c0_73, %c0_74] : memref<8x1xf32, #tpu.memory_space<vmem>>, vector<8x1xf32>
    %118 = vector.broadcast %117 : vector<8x1xf32> to vector<8x256xf32>
    %119 = arith.addf %116, %118 : vector<8x256xf32>
    %cst_75 = arith.constant 0.000000e+00 : f32
    %120 = vector.broadcast %cst_75 : f32 to vector<8x256xf32>
    %121 = arith.maximumf %119, %120 : vector<8x256xf32>
    %c0_76 = arith.constant 0 : index
    %c0_77 = arith.constant 0 : index
    %c0_78 = arith.constant 0 : index
    %122 = vector.load %arg9[%c0_76, %c0_77, %c0_78] : memref<1x8x256xf32, #tpu.memory_space<vmem>>, vector<1x8x256xf32>
    %123 = vector.shape_cast %122 : vector<1x8x256xf32> to vector<8x256xf32>
    %124 = vector.shape_cast %121 : vector<8x256xf32> to vector<1x8x256xf32>
    tpu.vector_store %arg9[%c0_76, %c0_77, %c0_78], %124 {strides = array<i32>} : memref<1x8x256xf32, #tpu.memory_space<vmem>>, vector<1x8x256xf32>,
    return
  }
  func.func @transform_0(%arg0: i32) -> (i32, i32, i32) {
    %c0_i32 = arith.constant 0 : i32
    %c0_i32_0 = arith.constant 0 : i32
    %c0_i32_1 = arith.constant 0 : i32
    return %arg0, %c0_i32, %c0_i32_0 : i32, i32, i32
  }
  func.func @transform_1(%arg0: i32) -> (i32, i32) {
    %c0_i32 = arith.constant 0 : i32
    %c0_i32_0 = arith.constant 0 : i32
    %c0_i32_1 = arith.constant 0 : i32
    return %c0_i32, %c0_i32_0 : i32, i32
  }
  func.func @transform_2(%arg0: i32) -> (i32, i32) {
    %c0_i32 = arith.constant 0 : i32
    %c0_i32_0 = arith.constant 0 : i32
    %c0_i32_1 = arith.constant 0 : i32
    return %c0_i32, %c0_i32_0 : i32, i32
  }
  func.func @transform_3(%arg0: i32) -> (i32, i32) {
    %c0_i32 = arith.constant 0 : i32
    %c0_i32_0 = arith.constant 0 : i32
    %c0_i32_1 = arith.constant 0 : i32
    return %c0_i32, %c0_i32_0 : i32, i32
  }
  func.func @transform_4(%arg0: i32) -> (i32, i32) {
    %c0_i32 = arith.constant 0 : i32
    %c0_i32_0 = arith.constant 0 : i32
    %c0_i32_1 = arith.constant 0 : i32
    return %c0_i32, %c0_i32_0 : i32, i32
  }
  func.func @transform_5(%arg0: i32) -> (i32, i32) {
    %c0_i32 = arith.constant 0 : i32
    %c0_i32_0 = arith.constant 0 : i32
    %c0_i32_1 = arith.constant 0 : i32
    return %c0_i32, %c0_i32_0 : i32, i32
  }
  func.func @transform_6(%arg0: i32) -> (i32, i32) {
    %c0_i32 = arith.constant 0 : i32
    %c0_i32_0 = arith.constant 0 : i32
    %c0_i32_1 = arith.constant 0 : i32
    return %c0_i32, %c0_i32_0 : i32, i32
  }
  func.func @transform_7(%arg0: i32) -> (i32, i32) {
    %c0_i32 = arith.constant 0 : i32
    %c0_i32_0 = arith.constant 0 : i32
    %c0_i32_1 = arith.constant 0 : i32
    return %c0_i32, %c0_i32_0 : i32, i32
  }
  func.func @transform_8(%arg0: i32) -> (i32, i32, i32) {
    %c0_i32 = arith.constant 0 : i32
    %c0_i32_0 = arith.constant 0 : i32
    %c0_i32_1 = arith.constant 0 : i32
    return %arg0, %c0_i32, %c0_i32_0 : i32, i32, i32
  }
}

</mosaic_0001>

<llo_original>
// kernel: tpu_custom_call.1
$region0: #{tpu_custom_call.1}
  #allocation0 [shape = 'u32[]', space=smem, size = 0x4, offset = 0x4, fixed_abs, tag = 'smem constant byte address 0x4 - core index']
  #allocation1 [shape = 'u32[72,128]{1,0:T(1,128)}', space=vmem, size = 0x9000, scoped, tag = 'internal scratch']
  %s0 = inlined_call_operand.hbm [shape: f32[2,4,256], index: 0, kind: input, shape index: {}]
  %s1 = inlined_call_operand.vmem [shape: f32[4,36], index: 1, kind: input, shape index: {}]
  %s2 = inlined_call_operand.vmem [shape: f32[4,1], index: 2, kind: input, shape index: {}]
  %s3 = inlined_call_operand.vmem [shape: f32[4,36], index: 3, kind: input, shape index: {}]
  %s4 = inlined_call_operand.vmem [shape: f32[4,1], index: 4, kind: input, shape index: {}]
  %s5 = inlined_call_operand.vmem [shape: f32[8,40], index: 5, kind: input, shape index: {}]
  %s6 = inlined_call_operand.vmem [shape: f32[8,1], index: 6, kind: input, shape index: {}]
  %s7 = inlined_call_operand.hbm [shape: f32[9,256], index: 7, kind: input, shape index: {}]
  %s8 = inlined_call_operand.hbm [shape: f32[2,8,256], index: 8, kind: output, shape index: {}]
  %s9 = sld [smem:[#allocation0]]
  $region73: #{tpu_custom_call.1} parent=0
    _
  %s11 = ssub.s32 1, %s9
  %s12 = scalar_select 0, %s11, %s9
  $region1: #{tpu_custom_call.1} parent=0
    #allocation2 [shape = 'u8[8192]{0}', space=vmem, size = 0x2000, scoped, tag = 'input window, operand 0']
    #allocation3 [shape = 's32[2]{0}', space=sflag, size = 0x8, scoped, tag = 'scoped memory for tpu_custom_call.1']
    #allocation4 [shape = 's32[2]{0}', space=sflag, size = 0x8, scoped, tag = 'scoped memory for tpu_custom_call.1']
    #allocation5 [shape = 'u8[16384]{0}', space=vmem, size = 0x4000, scoped, tag = 'input window, operand 7, single buffered']
    #allocation6 [shape = 's32[1]{0}', space=sflag, size = 0x4, scoped, tag = 'scoped memory for tpu_custom_call.1']
    #allocation7 [shape = 'u8[16384]{0}', space=vmem, size = 0x4000, scoped, tag = 'output window, operand 0']
    %13 = vsyncpa [#allocation3], 0
    %s14 = scalar_lea.sflag [#allocation3], 1
    %15 = vsyncpa %s14, 0
    %16 = vsyncpa [#allocation6], 0
    %17 = vsyncpa [#allocation4], 0
    %s18 = scalar_lea.sflag [#allocation4], 1
    %19 = vsyncpa %s18, 0
    loop: start=0, step=1, limit=4
    $region2: #{tpu_custom_call.1} parent=1 // loop_pre_header
      _
    $region3: #{tpu_custom_call.1} parent=1 // loop_header
      %s21 = sphi 0, %s25
      %p22 = scmp.ge.s32.totalorder %s21, 4
      %s31 = sphi 0, %s33
      %s34 = sphi 0, %s31
      %s35 = sphi 0, %s34
      %s51 = sphi 0, %s35
      %s55 = sphi 0, %s55
      %s57 = sphi 0, %s55
      %s58 = sphi 0, %s57
      %s72 = sphi 0, %s58
      %s76 = sphi 0, %s76
      %s78 = sphi 0, %s76
      %s79 = sphi 0, %s78
      %s93 = sphi 0, %s79
      %s97 = sphi 0, %s97
      %s99 = sphi 0, %s97
      %s100 = sphi 0, %s99
      %s114 = sphi 0, %s100
      %s118 = sphi 0, %s118
      %s120 = sphi 0, %s118
      %s121 = sphi 0, %s120
      %s135 = sphi 0, %s121
      %s139 = sphi 0, %s139
      %s141 = sphi 0, %s139
      %s142 = sphi 0, %s141
      %s156 = sphi 0, %s142
      %s160 = sphi 0, %s160
      %s162 = sphi 0, %s160
      %s163 = sphi 0, %s162
      %s177 = sphi 0, %s163
      %s181 = sphi 0, %s181
      %s183 = sphi 0, %s181
      %s184 = sphi 0, %s183
      %s198 = sphi 0, %s184
      %s204 = sphi 0, %s206
      %s207 = sphi 0, %s204
      %s208 = sphi 0, %s207
      %s224 = sphi 0, %s208
    $region4: #{tpu_custom_call.1} parent=1 // loop_header_branch
      %24 = sbr.rel (%p22) target = $region8
    $region5: #{tpu_custom_call.1} parent=1 // loop_body
      %s26 = ssub.s32 %s21, 1
      %s27 = ssub.s32 %s21, 2
      %s28 = sadd.s32 %s21, 1
      %s29 = ssub.s32 %s21, %s28
      %p30 = scmp.eq.s32.totalorder %s29, 0
      %s32 = sadd.s32 %s31, 1
      %s33 = scalar_select %p30, %s31, %s32
      %p36 = pneg %p30
      %p37 = scmp.eq.s32.totalorder %s21, 1
      %p38 = por %p36, %p37
      %p39 = scmp.ne.s32.totalorder %s31, %s34
      %p40 = scmp.eq.s32.totalorder %s21, 0
      %p41 = por %p39, %p40
      %p42 = scmp.ne.s32.totalorder %s31, %s34
      %p43 = scmp.eq.s32.totalorder %s26, 1
      %p44 = por %p42, %p43
      %p45 = scmp.ne.s32.totalorder %s34, %s35
      %p46 = scmp.eq.s32.totalorder %s26, 0
      %p47 = por %p45, %p46
      %p48 = scmp.ne.s32.totalorder %s34, %s35
      %p49 = scmp.eq.s32.totalorder %s27, 1
      %p50 = por %p48, %p49
      %p52 = scmp.ne.s32.totalorder %s35, %s51
      %p53 = scmp.eq.s32.totalorder %s27, 0
      %p54 = por %p52, %p53
      %s56 = sadd.s32 %s55, 1
      %p59 = scmp.eq.s32.totalorder %s21, 1
      %p60 = scmp.ne.s32.totalorder %s55, %s57
      %p61 = scmp.eq.s32.totalorder %s21, 0
      %p62 = por %p60, %p61
      %p63 = scmp.ne.s32.totalorder %s55, %s57
      %p64 = scmp.eq.s32.totalorder %s26, 1
      %p65 = por %p63, %p64
      %p66 = scmp.ne.s32.totalorder %s57, %s58
      %p67 = scmp.eq.s32.totalorder %s26, 0
      %p68 = por %p66, %p67
      %p69 = scmp.ne.s32.totalorder %s57, %s58
      %p70 = scmp.eq.s32.totalorder %s27, 1
      %p71 = por %p69, %p70
      %p73 = scmp.ne.s32.totalorder %s58, %s72
      %p74 = scmp.eq.s32.totalorder %s27, 0
      %p75 = por %p73, %p74
      %s77 = sadd.s32 %s76, 1
      %p80 = scmp.eq.s32.totalorder %s21, 1
      %p81 = scmp.ne.s32.totalorder %s76, %s78
      %p82 = scmp.eq.s32.totalorder %s21, 0
      %p83 = por %p81, %p82
      %p84 = scmp.ne.s32.totalorder %s76, %s78
      %p85 = scmp.eq.s32.totalorder %s26, 1
      %p86 = por %p84, %p85
      %p87 = scmp.ne.s32.totalorder %s78, %s79
      %p88 = scmp.eq.s32.totalorder %s26, 0
      %p89 = por %p87, %p88
      %p90 = scmp.ne.s32.totalorder %s78, %s79
      %p91 = scmp.eq.s32.totalorder %s27, 1
      %p92 = por %p90, %p91
      %p94 = scmp.ne.s32.totalorder %s79, %s93
      %p95 = scmp.eq.s32.totalorder %s27, 0
      %p96 = por %p94, %p95
      %s98 = sadd.s32 %s97, 1
      %p101 = scmp.eq.s32.totalorder %s21, 1
      %p102 = scmp.ne.s32.totalorder %s97, %s99
      %p103 = scmp.eq.s32.totalorder %s21, 0
      %p104 = por %p102, %p103
      %p105 = scmp.ne.s32.totalorder %s97, %s99
      %p106 = scmp.eq.s32.totalorder %s26, 1
      %p107 = por %p105, %p106
      %p108 = scmp.ne.s32.totalorder %s99, %s100
      %p109 = scmp.eq.s32.totalorder %s26, 0
      %p110 = por %p108, %p109
      %p111 = scmp.ne.s32.totalorder %s99, %s100
      %p112 = scmp.eq.s32.totalorder %s27, 1
      %p113 = por %p111, %p112
      %p115 = scmp.ne.s32.totalorder %s100, %s114
      %p116 = scmp.eq.s32.totalorder %s27, 0
      %p117 = por %p115, %p116
      %s119 = sadd.s32 %s118, 1
      %p122 = scmp.eq.s32.totalorder %s21, 1
      %p123 = scmp.ne.s32.totalorder %s118, %s120
      %p124 = scmp.eq.s32.totalorder %s21, 0
      %p125 = por %p123, %p124
      %p126 = scmp.ne.s32.totalorder %s118, %s120
      %p127 = scmp.eq.s32.totalorder %s26, 1
      %p128 = por %p126, %p127
      %p129 = scmp.ne.s32.totalorder %s120, %s121
      %p130 = scmp.eq.s32.totalorder %s26, 0
      %p131 = por %p129, %p130
      %p132 = scmp.ne.s32.totalorder %s120, %s121
      %p133 = scmp.eq.s32.totalorder %s27, 1
      %p134 = por %p132, %p133
      %p136 = scmp.ne.s32.totalorder %s121, %s135
      %p137 = scmp.eq.s32.totalorder %s27, 0
      %p138 = por %p136, %p137
      %s140 = sadd.s32 %s139, 1
      %p143 = scmp.eq.s32.totalorder %s21, 1
      %p144 = scmp.ne.s32.totalorder %s139, %s141
      %p145 = scmp.eq.s32.totalorder %s21, 0
      %p146 = por %p144, %p145
      %p147 = scmp.ne.s32.totalorder %s139, %s141
      %p148 = scmp.eq.s32.totalorder %s26, 1
      %p149 = por %p147, %p148
      %p150 = scmp.ne.s32.totalorder %s141, %s142
      %p151 = scmp.eq.s32.totalorder %s26, 0
      %p152 = por %p150, %p151
      %p153 = scmp.ne.s32.totalorder %s141, %s142
      %p154 = scmp.eq.s32.totalorder %s27, 1
      %p155 = por %p153, %p154
      %p157 = scmp.ne.s32.totalorder %s142, %s156
      %p158 = scmp.eq.s32.totalorder %s27, 0
      %p159 = por %p157, %p158
      %s161 = sadd.s32 %s160, 1
      %p164 = scmp.eq.s32.totalorder %s21, 1
      %p165 = scmp.ne.s32.totalorder %s160, %s162
      %p166 = scmp.eq.s32.totalorder %s21, 0
      %p167 = por %p165, %p166
      %p168 = scmp.ne.s32.totalorder %s160, %s162
      %p169 = scmp.eq.s32.totalorder %s26, 1
      %p170 = por %p168, %p169
      %p171 = scmp.ne.s32.totalorder %s162, %s163
      %p172 = scmp.eq.s32.totalorder %s26, 0
      %p173 = por %p171, %p172
      %p174 = scmp.ne.s32.totalorder %s162, %s163
      %p175 = scmp.eq.s32.totalorder %s27, 1
      %p176 = por %p174, %p175
      %p178 = scmp.ne.s32.totalorder %s163, %s177
      %p179 = scmp.eq.s32.totalorder %s27, 0
      %p180 = por %p178, %p179
      %s182 = sadd.s32 %s181, 1
      %p185 = scmp.eq.s32.totalorder %s21, 1
      %p186 = scmp.ne.s32.totalorder %s181, %s183
      %p187 = scmp.eq.s32.totalorder %s21, 0
      %p188 = por %p186, %p187
      %p189 = scmp.ne.s32.totalorder %s181, %s183
      %p190 = scmp.eq.s32.totalorder %s26, 1
      %p191 = por %p189, %p190
      %p192 = scmp.ne.s32.totalorder %s183, %s184
      %p193 = scmp.eq.s32.totalorder %s26, 0
      %p194 = por %p192, %p193
      %p195 = scmp.ne.s32.totalorder %s183, %s184
      %p196 = scmp.eq.s32.totalorder %s27, 1
      %p197 = por %p195, %p196
      %p199 = scmp.ne.s32.totalorder %s184, %s198
      %p200 = scmp.eq.s32.totalorder %s27, 0
      %p201 = por %p199, %p200
      %s202 = ssub.s32 %s21, %s28
      %p203 = scmp.eq.s32.totalorder %s202, 0
      %s205 = sadd.s32 %s204, 1
      %s206 = scalar_select %p203, %s204, %s205
      %p209 = pneg %p203
      %p210 = scmp.eq.s32.totalorder %s21, 1
      %p211 = por %p209, %p210
      %p212 = scmp.ne.s32.totalorder %s204, %s207
      %p213 = scmp.eq.s32.totalorder %s21, 0
      %p214 = por %p212, %p213
      %p215 = scmp.ne.s32.totalorder %s204, %s207
      %p216 = scmp.eq.s32.totalorder %s26, 1
      %p217 = por %p215, %p216
      %p218 = scmp.ne.s32.totalorder %s207, %s208
      %p219 = scmp.eq.s32.totalorder %s26, 0
      %p220 = por %p218, %p219
      %p221 = scmp.ne.s32.totalorder %s207, %s208
      %p222 = scmp.eq.s32.totalorder %s27, 1
      %p223 = por %p221, %p222
      %p225 = scmp.ne.s32.totalorder %s208, %s224
      %p226 = scmp.eq.s32.totalorder %s27, 0
      %p227 = por %p225, %p226
      %p228 = scmp.le.s32.totalorder 1, %s21
      %p229 = scmp.lt.s32.totalorder %s21, 3
      %p230 = pnand %p228, %p229
      %p231 = pneg %p230
      // Predicated region
      $region9: #{tpu_custom_call.1} parent=5 // pred_check
        _
      $region10: #{tpu_custom_call.1} parent=5 // pred_check_branch
        %233 = sbr.rel (%p230) target = $region12
      $region11: #{tpu_custom_call.1} parent=5 // pred_region
        %s234 = ssub.s32 %s21, 1
        // Predicated region
        $region13: #{tpu_custom_call.1} parent=11 // pred_check
          %p235 = pneg %p68
        $region14: #{tpu_custom_call.1} parent=11 // pred_check_branch
          %237 = sbr.rel (%p235) target = $region16
        $region15: #{tpu_custom_call.1} parent=11 // pred_region
          _
        $region16: #{tpu_custom_call.1} parent=11 // pred_fallthru
          _
        // Predicated region
        $region17: #{tpu_custom_call.1} parent=11 // pred_check
          %p238 = pneg %p89
        $region18: #{tpu_custom_call.1} parent=11 // pred_check_branch
          %240 = sbr.rel (%p238) target = $region20
        $region19: #{tpu_custom_call.1} parent=11 // pred_region
          _
        $region20: #{tpu_custom_call.1} parent=11 // pred_fallthru
          _
        // Predicated region
        $region21: #{tpu_custom_call.1} parent=11 // pred_check
          %p241 = pneg %p110
        $region22: #{tpu_custom_call.1} parent=11 // pred_check_branch
          %243 = sbr.rel (%p241) target = $region24
        $region23: #{tpu_custom_call.1} parent=11 // pred_region
          _
        $region24: #{tpu_custom_call.1} parent=11 // pred_fallthru
          _
        // Predicated region
        $region25: #{tpu_custom_call.1} parent=11 // pred_check
          %p244 = pneg %p131
        $region26: #{tpu_custom_call.1} parent=11 // pred_check_branch
          %246 = sbr.rel (%p244) target = $region28
        $region27: #{tpu_custom_call.1} parent=11 // pred_region
          _
        $region28: #{tpu_custom_call.1} parent=11 // pred_fallthru
          _
        // Predicated region
        $region29: #{tpu_custom_call.1} parent=11 // pred_check
          %p247 = pneg %p152
        $region30: #{tpu_custom_call.1} parent=11 // pred_check_branch
          %249 = sbr.rel (%p247) target = $region32
        $region31: #{tpu_custom_call.1} parent=11 // pred_region
          _
        $region32: #{tpu_custom_call.1} parent=11 // pred_fallthru
          _
        // Predicated region
        $region33: #{tpu_custom_call.1} parent=11 // pred_check
          %p250 = pneg %p173
        $region34: #{tpu_custom_call.1} parent=11 // pred_check_branch
          %252 = sbr.rel (%p250) target = $region36
        $region35: #{tpu_custom_call.1} parent=11 // pred_region
          _
        $region36: #{tpu_custom_call.1} parent=11 // pred_fallthru
          _
        // Predicated region
        $region37: #{tpu_custom_call.1} parent=11 // pred_check
          %p253 = pneg %p194
        $region38: #{tpu_custom_call.1} parent=11 // pred_check_branch
          %255 = sbr.rel (%p253) target = $region40
        $region39: #{tpu_custom_call.1} parent=11 // pred_region
          %257 = vsyncadd [#allocation6], 0
          %s258 = sshll.u32 %s7, 4
          %s259 = int_to_ptr.hbm [resolvable:$true] %s258
          %s260 = sshll.u32 [#allocation5], 4
          %s261 = int_to_ptr.vmem [resolvable:$true] %s260
          %266 = dma.hbm_to_vmem [thread:$0]  %s259, 512, %s261, [#allocation6], 256, 256, 16
        $region40: #{tpu_custom_call.1} parent=11 // pred_fallthru
          _
      $region12: #{tpu_custom_call.1} parent=5 // pred_fallthru
        _
      %p267 = scmp.lt.s32.totalorder %s21, 2
      // Predicated region
      $region41: #{tpu_custom_call.1} parent=5 // pred_check
        %p268 = pneg %p267
      $region42: #{tpu_custom_call.1} parent=5 // pred_check_branch
        %270 = sbr.rel (%p268) target = $region44
      $region43: #{tpu_custom_call.1} parent=5 // pred_region
        // Predicated region
        $region45: #{tpu_custom_call.1} parent=43 // pred_check
          %p271 = pneg %p41
        $region46: #{tpu_custom_call.1} parent=43 // pred_check_branch
          %273 = sbr.rel (%p271) target = $region48
        $region47: #{tpu_custom_call.1} parent=43 // pred_region
          %s274 = sand.u32 %s31, 1
          %s275 = scalar_lea.sflag [#allocation3], %s274
          %s276 = sand.u32 %s31, 1
          %s277 = smul.addr %s276, 8
          %s278 = scalar_lea.vmem [#allocation2], %s277
          %280 = vsyncadd %s275, 0
          %s281 = smul.addr %s21, 2
          %s282 = smul.addr %s281, 4
          %s283 = scalar_lea.hbm %s0, %s282
          %s285 = sshll.u32 %s283, 4
          %s286 = int_to_ptr.hbm [resolvable:$true] %s285
          %s287 = sshll.u32 %s278, 4
          %s288 = int_to_ptr.vmem [resolvable:$true] %s287
          %290 = dma.hbm_to_vmem [thread:$0]  %s286, 128, %s288, %s275
        $region48: #{tpu_custom_call.1} parent=43 // pred_fallthru
          _
      $region44: #{tpu_custom_call.1} parent=5 // pred_fallthru
        _
      %p291 = scmp.le.s32.totalorder 1, %s21
      %p292 = scmp.lt.s32.totalorder %s21, 3
      %p293 = pnand %p291, %p292
      %p294 = pneg %p293
      // Predicated region
      $region49: #{tpu_custom_call.1} parent=5 // pred_check
        _
      $region50: #{tpu_custom_call.1} parent=5 // pred_check_branch
        %296 = sbr.rel (%p293) target = $region52
      $region51: #{tpu_custom_call.1} parent=5 // pred_region
        %s297 = ssub.s32 %s21, 1
        %s298 = sand.u32 %s34, 1
        %s299 = scalar_lea.sflag [#allocation3], %s298
        %s300 = sand.u32 %s34, 1
        %s301 = smul.addr %s300, 8
        %s302 = scalar_lea.vmem [#allocation2], %s301
        // Predicated region
        $region53: #{tpu_custom_call.1} parent=51 // pred_check
          %p303 = pneg %p47
        $region54: #{tpu_custom_call.1} parent=51 // pred_check_branch
          %305 = sbr.rel (%p303) target = $region56
        $region55: #{tpu_custom_call.1} parent=51 // pred_region
          %307 = dma.done %s299, 128
        $region56: #{tpu_custom_call.1} parent=51 // pred_fallthru
          _
        // Predicated region
        $region57: #{tpu_custom_call.1} parent=51 // pred_check
          %p308 = pneg %p194
        $region58: #{tpu_custom_call.1} parent=51 // pred_check_branch
          %310 = sbr.rel (%p308) target = $region60
        $region59: #{tpu_custom_call.1} parent=51 // pred_region
          %312 = dma.done [#allocation6], 512
        $region60: #{tpu_custom_call.1} parent=51 // pred_fallthru
          _
        %s313 = sand.u32 %s34, 1
        %s314 = scalar_lea.sflag [#allocation3], %s313
        %s315 = sand.u32 %s34, 1
        %s316 = smul.addr %s315, 8
        %s317 = scalar_lea.vmem [#allocation2], %s316
        %p318 = pneg %p47
        %p319 = pneg %p44
        %p320 = pneg %p68
        %p321 = pneg %p65
        %p322 = pneg %p89
        %p323 = pneg %p86
        %p324 = pneg %p110
        %p325 = pneg %p107
        %p326 = pneg %p131
        %p327 = pneg %p128
        %p328 = pneg %p152
        %p329 = pneg %p149
        %p330 = pneg %p173
        %p331 = pneg %p170
        %p332 = pneg %p194
        %p333 = pneg %p191
        %p334 = pneg %p220
        %p335 = pneg %p217
        %s336 = sand.u32 %s207, 1
        %s337 = scalar_lea.sflag [#allocation4], %s336
        %s338 = sand.u32 %s207, 1
        %s339 = smul.addr %s338, 16
        %s340 = scalar_lea.vmem [#allocation7], %s339
        %v341 = vld [vmem:[%s302] sm:$0xff]
        %343 = vst [vmem:[#allocation1] ss:$2 sm:$0xff] %v341
        %v344 = vld.sshfl [vmem:[#allocation1] sm:$0xff pattern:$0x75316420]
        %v345 = vld.sshfl [vmem:[#allocation1 + $0x8] sm:$0xff pattern:$0x75316420]
        %348 = vrot.lane.b32.xlu0 %v344, 17
        %v349 = vpop.permute.xlu0 %348
        %350 = vrot.lane.b32.xlu0 %v345, 17
        %v351 = vpop.permute.xlu0 %350
        %v352 = vlaneseq
        %v353 = vand.u32 %v352, 127
        %vm354 = vcmp.lt.s32.totalorder %v353, 17
        %v355 = vsel %vm354, %v349, %v351
        %v356 = vsel %vm354, %v351, %v349
        %v357 = vld [vmem:[#allocation5] ss:$8 sm:$0x3]
        %v359 = vperm.slane %v357, 0
        %v360 = vperm.slane %v357, 1
        %v363 = vmul.f32 %v356, %v359
        %v364 = vmul.f32 %v355, %v360
        %365 = vst [vmem:[#allocation1] ss:$2 sm:$0xff] %v341
        %v366 = vld.sshfl [vmem:[#allocation1] sm:$0xff pattern:$0x75316420]
        %v367 = vld.sshfl [vmem:[#allocation1 + $0x8] sm:$0xff pattern:$0x75316420]
        %370 = vrot.lane.b32.xlu0 %v366, 16
        %v371 = vpop.permute.xlu0 %370
        %372 = vrot.lane.b32.xlu0 %v367, 16
        %v373 = vpop.permute.xlu0 %372
        %vm374 = vcmp.lt.s32.totalorder %v353, 16
        %v375 = vsel %vm374, %v371, %v373
        %v376 = vsel %vm374, %v373, %v371
        %s377 = scalar_lea.vmem [#allocation5], 1
        %v378 = vld [vmem:[%s377] ss:$8 sm:$0x3]
        %v380 = vperm.slane %v378, 0
        %v381 = vperm.slane %v378, 1
        %v384 = vmul.f32 %v376, %v380
        %v385 = vmul.f32 %v375, %v381
        %386 = vst [vmem:[#allocation1] ss:$2 sm:$0xff] %v341
        %v387 = vld.sshfl [vmem:[#allocation1] sm:$0xff pattern:$0x75316420]
        %v388 = vld.sshfl [vmem:[#allocation1 + $0x8] sm:$0xff pattern:$0x75316420]
        %391 = vrot.lane.b32.xlu0 %v387, 15
        %v392 = vpop.permute.xlu0 %391
        %393 = vrot.lane.b32.xlu0 %v388, 15
        %v394 = vpop.permute.xlu0 %393
        %vm395 = vcmp.lt.s32.totalorder %v353, 15
        %v396 = vsel %vm395, %v392, %v394
        %v397 = vsel %vm395, %v394, %v392
        %s398 = scalar_lea.vmem [#allocation5], 2
        %v399 = vld [vmem:[%s398] ss:$8 sm:$0x3]
        %v401 = vperm.slane %v399, 0
        %v402 = vperm.slane %v399, 1
        %v405 = vmul.f32 %v397, %v401
        %v406 = vmul.f32 %v396, %v402
        %407 = vst [vmem:[#allocation1] ss:$2 sm:$0xff] %v341
        %v408 = vld.sshfl [vmem:[#allocation1] sm:$0xff pattern:$0x75316420]
        %v409 = vld.sshfl [vmem:[#allocation1 + $0x8] sm:$0xff pattern:$0x75316420]
        %412 = vrot.lane.b32.xlu0 %v408, 1
        %v413 = vpop.permute.xlu0 %412
        %414 = vrot.lane.b32.xlu0 %v409, 1
        %v415 = vpop.permute.xlu0 %414
        %vm416 = vcmp.lt.s32.totalorder %v353, 1
        %v417 = vsel %vm416, %v413, %v415
        %v418 = vsel %vm416, %v415, %v413
        %s419 = scalar_lea.vmem [#allocation5], 3
        %v420 = vld [vmem:[%s419] ss:$8 sm:$0x3]
        %v422 = vperm.slane %v420, 0
        %v423 = vperm.slane %v420, 1
        %v426 = vmul.f32 %v418, %v422
        %v427 = vmul.f32 %v417, %v423
        %428 = vst [vmem:[#allocation1] ss:$2 sm:$0xff] %v341
        %v429 = vld.sshfl [vmem:[#allocation1] sm:$0xff pattern:$0x75316420]
        %v430 = vld.sshfl [vmem:[#allocation1 + $0x8] sm:$0xff pattern:$0x75316420]
        %433 = vrot.lane.b32.xlu0 %v429, 127
        %v434 = vpop.permute.xlu0 %433
        %435 = vrot.lane.b32.xlu0 %v430, 127
        %v436 = vpop.permute.xlu0 %435
        %vm437 = vcmp.lt.s32.totalorder %v353, 127
        %v438 = vsel %vm437, %v434, %v436
        %v439 = vsel %vm437, %v436, %v434
        %s440 = scalar_lea.vmem [#allocation5], 5
        %v441 = vld [vmem:[%s440] ss:$8 sm:$0x3]
        %v443 = vperm.slane %v441, 0
        %v444 = vperm.slane %v441, 1
        %v447 = vmul.f32 %v438, %v443
        %v448 = vmul.f32 %v439, %v444
        %449 = vst [vmem:[#allocation1] ss:$2 sm:$0xff] %v341
        %v450 = vld.sshfl [vmem:[#allocation1] sm:$0xff pattern:$0x75316420]
        %v451 = vld.sshfl [vmem:[#allocation1 + $0x8] sm:$0xff pattern:$0x75316420]
        %454 = vrot.lane.b32.xlu0 %v450, 113
        %v455 = vpop.permute.xlu0 %454
        %456 = vrot.lane.b32.xlu0 %v451, 113
        %v457 = vpop.permute.xlu0 %456
        %vm458 = vcmp.lt.s32.totalorder %v353, 113
        %v459 = vsel %vm458, %v455, %v457
        %v460 = vsel %vm458, %v457, %v455
        %s461 = scalar_lea.vmem [#allocation5], 6
        %v462 = vld [vmem:[%s461] ss:$8 sm:$0x3]
        %v464 = vperm.slane %v462, 0
        %v465 = vperm.slane %v462, 1
        %v468 = vmul.f32 %v459, %v464
        %v469 = vmul.f32 %v460, %v465
        %470 = vst [vmem:[#allocation1] ss:$2 sm:$0xff] %v341
        %v471 = vld.sshfl [vmem:[#allocation1] sm:$0xff pattern:$0x75316420]
        %v472 = vld.sshfl [vmem:[#allocation1 + $0x8] sm:$0xff pattern:$0x75316420]
        %475 = vrot.lane.b32.xlu0 %v471, 112
        %v476 = vpop.permute.xlu0 %475
        %477 = vrot.lane.b32.xlu0 %v472, 112
        %v478 = vpop.permute.xlu0 %477
        %vm479 = vcmp.lt.s32.totalorder %v353, 112
        %v480 = vsel %vm479, %v476, %v478
        %v481 = vsel %vm479, %v478, %v476
        %s482 = scalar_lea.vmem [#allocation5], 7
        %v483 = vld [vmem:[%s482] ss:$8 sm:$0x3]
        %v485 = vperm.slane %v483, 0
        %v486 = vperm.slane %v483, 1
        %v489 = vmul.f32 %v480, %v485
        %v490 = vmul.f32 %v481, %v486
        %491 = vst [vmem:[#allocation1] ss:$2 sm:$0xff] %v341
        %v492 = vld.sshfl [vmem:[#allocation1] sm:$0xff pattern:$0x75316420]
        %v493 = vld.sshfl [vmem:[#allocation1 + $0x8] sm:$0xff pattern:$0x75316420]
        %496 = vrot.lane.b32.xlu0 %v492, 111
        %v497 = vpop.permute.xlu0 %496
        %498 = vrot.lane.b32.xlu0 %v493, 111
        %v499 = vpop.permute.xlu0 %498
        %vm500 = vcmp.lt.s32.totalorder %v353, 111
        %v501 = vsel %vm500, %v497, %v499
        %v502 = vsel %vm500, %v499, %v497
        %s503 = scalar_lea.vmem [#allocation5], 16
        %v504 = vld [vmem:[%s503] ss:$8 sm:$0x3]
        %v506 = vperm.slane %v504, 0
        %v507 = vperm.slane %v504, 1
        %v510 = vmul.f32 %v501, %v506
        %v511 = vmul.f32 %v502, %v507
        %v514 = vrot.slane %v384, 4
        %v515 = vrot.slane %v385, 4
        %v520 = vrot.slane %v426, 4
        %v521 = vrot.slane %v427, 4
        %524 = vst [vmem:[#allocation1] ss:$2 sm:$0xff] %v341
        %v525 = vld.sshfl [vmem:[#allocation1] sm:$0xff pattern:$0x75316420]
        %v526 = vld.sshfl [vmem:[#allocation1 + $0x8] sm:$0xff pattern:$0x75316420]
        %v531 = vrot.slane %v447, 4
        %v532 = vrot.slane %v448, 4
        %v537 = vrot.slane %v489, 4
        %v538 = vrot.slane %v490, 4
        %vm541 = vcmask 1043456
        %v542 = vsel %vm541, %v363, %v514
        %v543 = vsel %vm541, %v364, %v515
        %v544 = vsel %vm541, %v405, %v520
        %v545 = vsel %vm541, %v406, %v521
        %v546 = vsel %vm541, %v525, %v531
        %v547 = vsel %vm541, %v526, %v532
        %v548 = vsel %vm541, %v468, %v537
        %v549 = vsel %vm541, %v469, %v538
        %v550 = vld [vmem:[%s1] sm:$0xf]
        %v551 = vld [vmem:[%s2] sm:$0xf]
        %553 = vset.pattern.permute.xlu0 0
        %554 = vperm.xlu0 %553, %v551
        %v555 = vpop.permute.xlu0 %554
        %vm557 = vcmask 293888
        %v559 = vsel %vm557, %v550, 0
        %v562 = vsel %vm541, %v510, 0
        %v565 = vsel %vm541, %v511, 0
        %567 = vmatpush.msra.mxu0 0.0
        %568 = vmatpush.msra.mxu0 0.0
        %569 = vmatpush.msra.mxu0 0.0
        %570 = vmatpush.msra.mxu0 0.0
        %571 = vmatpush.msra.mxu0 0.0
        %572 = vmatpush.msra.mxu0 0.0
        %573 = vmatpush.msra.mxu0 0.0
        %574 = vmatpush.msra.mxu0 0.0
        %575 = vmatpush.msra.mxu0 0.0
        %576 = vmatpush.msra.mxu0 0.0
        %577 = vmatpush.msra.mxu0 0.0
        %578 = vmatpush.msra.mxu0 %v562
        %579 = vmatpush.msra.mxu0 %v548
        %580 = vmatpush.msra.mxu0 %v546
        %581 = vmatpush.msra.mxu0 %v544
        %582 = vmatpush.msra.mxu0 %v542
        %583 = vmatmul.f32.gmra.mxu0 %v559
        %v584 = vpop.f32.mrf.mxu0
        %v585 = vadd.f32 %v555, %v584
        %586 = vdwg.mxu0
        %587 = vmatpush.msra.mxu0 0.0
        %588 = vmatpush.msra.mxu0 0.0
        %589 = vmatpush.msra.mxu0 0.0
        %590 = vmatpush.msra.mxu0 0.0
        %591 = vmatpush.msra.mxu0 0.0
        %592 = vmatpush.msra.mxu0 0.0
        %593 = vmatpush.msra.mxu0 0.0
        %594 = vmatpush.msra.mxu0 0.0
        %595 = vmatpush.msra.mxu0 0.0
        %596 = vmatpush.msra.mxu0 0.0
        %597 = vmatpush.msra.mxu0 0.0
        %598 = vmatpush.msra.mxu0 %v565
        %599 = vmatpush.msra.mxu0 %v549
        %600 = vmatpush.msra.mxu0 %v547
        %601 = vmatpush.msra.mxu0 %v545
        %602 = vmatpush.msra.mxu0 %v543
        %603 = vmatmul.f32.gmra.mxu0 %v559
        %v604 = vpop.f32.mrf.mxu0
        %v605 = vadd.f32 %v555, %v604
        %606 = vdwg.mxu0
        %v607 = vmax.f32 %v585, 0.0
        %v608 = vmax.f32 %v605, 0.0
        %609 = vrot.lane.b32.xlu0 %v607, 17
        %v610 = vpop.permute.xlu0 %609
        %611 = vrot.lane.b32.xlu0 %v608, 17
        %v612 = vpop.permute.xlu0 %611
        %v613 = vsel %vm354, %v610, %v612
        %v614 = vsel %vm354, %v612, %v610
        %v615 = vmul.f32 %v614, %v359
        %v616 = vmul.f32 %v613, %v360
        %617 = vrot.lane.b32.xlu0 %v607, 16
        %v618 = vpop.permute.xlu0 %617
        %619 = vrot.lane.b32.xlu0 %v608, 16
        %v620 = vpop.permute.xlu0 %619
        %v621 = vsel %vm374, %v618, %v620
        %v622 = vsel %vm374, %v620, %v618
        %v623 = vmul.f32 %v622, %v380
        %v624 = vmul.f32 %v621, %v381
        %625 = vrot.lane.b32.xlu0 %v607, 15
        %v626 = vpop.permute.xlu0 %625
        %627 = vrot.lane.b32.xlu0 %v608, 15
        %v628 = vpop.permute.xlu0 %627
        %v629 = vsel %vm395, %v626, %v628
        %v630 = vsel %vm395, %v628, %v626
        %v631 = vmul.f32 %v630, %v401
        %v632 = vmul.f32 %v629, %v402
        %633 = vrot.lane.b32.xlu0 %v607, 1
        %v634 = vpop.permute.xlu0 %633
        %635 = vrot.lane.b32.xlu0 %v608, 1
        %v636 = vpop.permute.xlu0 %635
        %v637 = vsel %vm416, %v634, %v636
        %v638 = vsel %vm416, %v636, %v634
        %v639 = vmul.f32 %v638, %v422
        %v640 = vmul.f32 %v637, %v423
        %641 = vrot.lane.b32.xlu0 %v607, 127
        %v642 = vpop.permute.xlu0 %641
        %643 = vrot.lane.b32.xlu0 %v608, 127
        %v644 = vpop.permute.xlu0 %643
        %v645 = vsel %vm437, %v642, %v644
        %v646 = vsel %vm437, %v644, %v642
        %v647 = vmul.f32 %v645, %v443
        %v648 = vmul.f32 %v646, %v444
        %649 = vrot.lane.b32.xlu0 %v607, 113
        %v650 = vpop.permute.xlu0 %649
        %651 = vrot.lane.b32.xlu0 %v608, 113
        %v652 = vpop.permute.xlu0 %651
        %v653 = vsel %vm458, %v650, %v652
        %v654 = vsel %vm458, %v652, %v650
        %v655 = vmul.f32 %v653, %v464
        %v656 = vmul.f32 %v654, %v465
        %657 = vrot.lane.b32.xlu0 %v607, 112
        %v658 = vpop.permute.xlu0 %657
        %659 = vrot.lane.b32.xlu0 %v608, 112
        %v660 = vpop.permute.xlu0 %659
        %v661 = vsel %vm479, %v658, %v660
        %v662 = vsel %vm479, %v660, %v658
        %v663 = vmul.f32 %v661, %v485
        %v664 = vmul.f32 %v662, %v486
        %665 = vrot.lane.b32.xlu0 %v607, 111
        %v666 = vpop.permute.xlu0 %665
        %667 = vrot.lane.b32.xlu0 %v608, 111
        %v668 = vpop.permute.xlu0 %667
        %v669 = vsel %vm500, %v666, %v668
        %v670 = vsel %vm500, %v668, %v666
        %v671 = vmul.f32 %v669, %v506
        %v672 = vmul.f32 %v670, %v507
        %v675 = vrot.slane %v623, 4
        %v676 = vrot.slane %v624, 4
        %v681 = vrot.slane %v639, 4
        %v682 = vrot.slane %v640, 4
        %v687 = vrot.slane %v647, 4
        %v688 = vrot.slane %v648, 4
        %v693 = vrot.slane %v663, 4
        %v694 = vrot.slane %v664, 4
        %v697 = vsel %vm541, %v615, %v675
        %v698 = vsel %vm541, %v616, %v676
        %v699 = vsel %vm541, %v631, %v681
        %v700 = vsel %vm541, %v632, %v682
        %v701 = vsel %vm541, %v607, %v687
        %v702 = vsel %vm541, %v608, %v688
        %v703 = vsel %vm541, %v655, %v693
        %v704 = vsel %vm541, %v656, %v694
        %v705 = vld [vmem:[%s3] sm:$0xf]
        %v706 = vld [vmem:[%s4] sm:$0xf]
        %708 = vset.pattern.permute.xlu0 0
        %709 = vperm.xlu0 %708, %v706
        %v710 = vpop.permute.xlu0 %709
        %v713 = vsel %vm557, %v705, 0
        %v716 = vsel %vm541, %v671, 0
        %v719 = vsel %vm541, %v672, 0
        %721 = vmatpush.msra.mxu0 0.0
        %722 = vmatpush.msra.mxu0 0.0
        %723 = vmatpush.msra.mxu0 0.0
        %724 = vmatpush.msra.mxu0 0.0
        %725 = vmatpush.msra.mxu0 0.0
        %726 = vmatpush.msra.mxu0 0.0
        %727 = vmatpush.msra.mxu0 0.0
        %728 = vmatpush.msra.mxu0 0.0
        %729 = vmatpush.msra.mxu0 0.0
        %730 = vmatpush.msra.mxu0 0.0
        %731 = vmatpush.msra.mxu0 0.0
        %732 = vmatpush.msra.mxu0 %v716
        %733 = vmatpush.msra.mxu0 %v703
        %734 = vmatpush.msra.mxu0 %v701
        %735 = vmatpush.msra.mxu0 %v699
        %736 = vmatpush.msra.mxu0 %v697
        %737 = vmatmul.f32.gmra.mxu0 %v713
        %v738 = vpop.f32.mrf.mxu0
        %v739 = vadd.f32 %v710, %v738
        %740 = vdwg.mxu0
        %741 = vmatpush.msra.mxu0 0.0
        %742 = vmatpush.msra.mxu0 0.0
        %743 = vmatpush.msra.mxu0 0.0
        %744 = vmatpush.msra.mxu0 0.0
        %745 = vmatpush.msra.mxu0 0.0
        %746 = vmatpush.msra.mxu0 0.0
        %747 = vmatpush.msra.mxu0 0.0
        %748 = vmatpush.msra.mxu0 0.0
        %749 = vmatpush.msra.mxu0 0.0
        %750 = vmatpush.msra.mxu0 0.0
        %751 = vmatpush.msra.mxu0 0.0
        %752 = vmatpush.msra.mxu0 %v719
        %753 = vmatpush.msra.mxu0 %v704
        %754 = vmatpush.msra.mxu0 %v702
        %755 = vmatpush.msra.mxu0 %v700
        %756 = vmatpush.msra.mxu0 %v698
        %757 = vmatmul.f32.gmra.mxu0 %v713
        %v758 = vpop.f32.mrf.mxu0
        %v759 = vadd.f32 %v710, %v758
        %760 = vdwg.mxu0
        %v761 = vmax.f32 %v739, 0.0
        %v762 = vmax.f32 %v759, 0.0
        %763 = vrot.lane.b32.xlu0 %v761, 17
        %v764 = vpop.permute.xlu0 %763
        %765 = vrot.lane.b32.xlu0 %v762, 17
        %v766 = vpop.permute.xlu0 %765
        %v767 = vsel %vm354, %v764, %v766
        %v768 = vsel %vm354, %v766, %v764
        %v769 = vmul.f32 %v768, %v359
        %v770 = vmul.f32 %v767, %v360
        %771 = vrot.lane.b32.xlu0 %v761, 16
        %v772 = vpop.permute.xlu0 %771
        %773 = vrot.lane.b32.xlu0 %v762, 16
        %v774 = vpop.permute.xlu0 %773
        %v775 = vsel %vm374, %v772, %v774
        %v776 = vsel %vm374, %v774, %v772
        %v777 = vmul.f32 %v776, %v380
        %v778 = vmul.f32 %v775, %v381
        %779 = vrot.lane.b32.xlu0 %v761, 15
        %v780 = vpop.permute.xlu0 %779
        %781 = vrot.lane.b32.xlu0 %v762, 15
        %v782 = vpop.permute.xlu0 %781
        %v783 = vsel %vm395, %v780, %v782
        %v784 = vsel %vm395, %v782, %v780
        %v785 = vmul.f32 %v784, %v401
        %v786 = vmul.f32 %v783, %v402
        %787 = vrot.lane.b32.xlu0 %v761, 1
        %v788 = vpop.permute.xlu0 %787
        %789 = vrot.lane.b32.xlu0 %v762, 1
        %v790 = vpop.permute.xlu0 %789
        %v791 = vsel %vm416, %v788, %v790
        %v792 = vsel %vm416, %v790, %v788
        %v793 = vmul.f32 %v792, %v422
        %v794 = vmul.f32 %v791, %v423
        %795 = vrot.lane.b32.xlu0 %v761, 127
        %v796 = vpop.permute.xlu0 %795
        %797 = vrot.lane.b32.xlu0 %v762, 127
        %v798 = vpop.permute.xlu0 %797
        %v799 = vsel %vm437, %v796, %v798
        %v800 = vsel %vm437, %v798, %v796
        %v801 = vmul.f32 %v799, %v443
        %v802 = vmul.f32 %v800, %v444
        %803 = vrot.lane.b32.xlu0 %v761, 113
        %v804 = vpop.permute.xlu0 %803
        %805 = vrot.lane.b32.xlu0 %v762, 113
        %v806 = vpop.permute.xlu0 %805
        %v807 = vsel %vm458, %v804, %v806
        %v808 = vsel %vm458, %v806, %v804
        %v809 = vmul.f32 %v807, %v464
        %v810 = vmul.f32 %v808, %v465
        %811 = vrot.lane.b32.xlu0 %v761, 112
        %v812 = vpop.permute.xlu0 %811
        %813 = vrot.lane.b32.xlu0 %v762, 112
        %v814 = vpop.permute.xlu0 %813
        %v815 = vsel %vm479, %v812, %v814
        %v816 = vsel %vm479, %v814, %v812
        %v817 = vmul.f32 %v815, %v485
        %v818 = vmul.f32 %v816, %v486
        %819 = vrot.lane.b32.xlu0 %v761, 111
        %v820 = vpop.permute.xlu0 %819
        %821 = vrot.lane.b32.xlu0 %v762, 111
        %v822 = vpop.permute.xlu0 %821
        %v823 = vsel %vm500, %v820, %v822
        %v824 = vsel %vm500, %v822, %v820
        %v825 = vmul.f32 %v823, %v506
        %v826 = vmul.f32 %v824, %v507
        %v829 = vrot.slane %v777, 4
        %v830 = vrot.slane %v778, 4
        %v835 = vrot.slane %v793, 4
        %v836 = vrot.slane %v794, 4
        %v841 = vrot.slane %v801, 4
        %v842 = vrot.slane %v802, 4
        %v847 = vrot.slane %v817, 4
        %v848 = vrot.slane %v818, 4
        %s851 = scalar_lea.vmem [#allocation1], 1
        %852 = vst [vmem:[%s851] ss:$2 sm:$0xff] %v341
        %v853 = vld.sshfl [vmem:[#allocation1] sm:$0xff pattern:$0x75316420]
        %v854 = vld.sshfl [vmem:[#allocation1 + $0x8] sm:$0xff pattern:$0x75316420]
        %v857 = vsel %vm541, %v769, %v829
        %v858 = vsel %vm541, %v770, %v830
        %v859 = vsel %vm541, %v785, %v835
        %v860 = vsel %vm541, %v786, %v836
        %v861 = vsel %vm541, %v761, %v841
        %v862 = vsel %vm541, %v762, %v842
        %v863 = vsel %vm541, %v809, %v847
        %v864 = vsel %vm541, %v810, %v848
        %v865 = vsel %vm541, %v825, %v853
        %v866 = vsel %vm541, %v826, %v854
        %v867 = vld [vmem:[%s5] sm:$0xff]
        %v868 = vld [vmem:[%s6] sm:$0xff]
        %870 = vset.pattern.permute.xlu0 0
        %871 = vperm.xlu0 %870, %v868
        %v872 = vpop.permute.xlu0 %871
        %vm874 = vcmask 326656
        %v876 = vsel %vm874, %v867, 0
        %878 = vmatpush.msra.mxu0 0.0
        %879 = vmatpush.msra.mxu0 0.0
        %880 = vmatpush.msra.mxu0 0.0
        %881 = vmatpush.msra.mxu0 0.0
        %882 = vmatpush.msra.mxu0 0.0
        %883 = vmatpush.msra.mxu0 0.0
        %884 = vmatpush.msra.mxu0 0.0
        %885 = vmatpush.msra.mxu0 0.0
        %886 = vmatpush.msra.mxu0 0.0
        %887 = vmatpush.msra.mxu0 0.0
        %888 = vmatpush.msra.mxu0 0.0
        %889 = vmatpush.msra.mxu0 %v865
        %890 = vmatpush.msra.mxu0 %v863
        %891 = vmatpush.msra.mxu0 %v861
        %892 = vmatpush.msra.mxu0 %v859
        %893 = vmatpush.msra.mxu0 %v857
        %894 = vmatmul.f32.gmra.mxu0 %v876
        %v895 = vpop.f32.mrf.mxu0
        %v896 = vadd.f32 %v872, %v895
        %897 = vdwg.mxu0
        %898 = vmatpush.msra.mxu0 0.0
        %899 = vmatpush.msra.mxu0 0.0
        %900 = vmatpush.msra.mxu0 0.0
        %901 = vmatpush.msra.mxu0 0.0
        %902 = vmatpush.msra.mxu0 0.0
        %903 = vmatpush.msra.mxu0 0.0
        %904 = vmatpush.msra.mxu0 0.0
        %905 = vmatpush.msra.mxu0 0.0
        %906 = vmatpush.msra.mxu0 0.0
        %907 = vmatpush.msra.mxu0 0.0
        %908 = vmatpush.msra.mxu0 0.0
        %909 = vmatpush.msra.mxu0 %v866
        %910 = vmatpush.msra.mxu0 %v864
        %911 = vmatpush.msra.mxu0 %v862
        %912 = vmatpush.msra.mxu0 %v860
        %913 = vmatpush.msra.mxu0 %v858
        %914 = vmatmul.f32.gmra.mxu0 %v876
        %v915 = vpop.f32.mrf.mxu0
        %v916 = vadd.f32 %v872, %v915
        %917 = vdwg.mxu0
        %v918 = vmax.f32 %v896, 0.0
        %v919 = vmax.f32 %v916, 0.0
        %920 = vst [vmem:[%s340] sm:$0xff] %v918
        %921 = vst [vmem:[%s340 + $0x8] sm:$0xff] %v919
        %s922 = sand.u32 %s207, 1
        %s923 = scalar_lea.sflag [#allocation4], %s922
        %s924 = sand.u32 %s207, 1
        %s925 = smul.addr %s924, 16
        %s926 = scalar_lea.vmem [#allocation7], %s925
        // Predicated region
        $region61: #{tpu_custom_call.1} parent=51 // pred_check
          %p927 = pneg %p217
        $region62: #{tpu_custom_call.1} parent=51 // pred_check_branch
          %929 = sbr.rel (%p927) target = $region64
        $region63: #{tpu_custom_call.1} parent=51 // pred_region
          %931 = vsyncadd %s923, 0
          %s932 = smul.addr %s26, 2
          %s933 = smul.addr %s932, 8
          %s934 = scalar_lea.hbm %s8, %s933
          %s936 = sshll.u32 %s926, 4
          %s937 = int_to_ptr.vmem [resolvable:$true] %s936
          %s938 = sshll.u32 %s934, 4
          %s939 = int_to_ptr.hbm [resolvable:$true] %s938
          %941 = dma.vmem_to_hbm [thread:$0]  %s937, 256, %s939, %s923
        $region64: #{tpu_custom_call.1} parent=51 // pred_fallthru
          _
      $region52: #{tpu_custom_call.1} parent=5 // pred_fallthru
        _
      %p942 = scmp.le.s32.totalorder 2, %s21
      // Predicated region
      $region65: #{tpu_custom_call.1} parent=5 // pred_check
        %p943 = pneg %p942
      $region66: #{tpu_custom_call.1} parent=5 // pred_check_branch
        %945 = sbr.rel (%p943) target = $region68
      $region67: #{tpu_custom_call.1} parent=5 // pred_region
        %s946 = ssub.s32 %s21, 2
        // Predicated region
        $region69: #{tpu_custom_call.1} parent=67 // pred_check
          %p947 = pneg %p223
        $region70: #{tpu_custom_call.1} parent=67 // pred_check_branch
          %949 = sbr.rel (%p947) target = $region72
        $region71: #{tpu_custom_call.1} parent=67 // pred_region
          %s950 = sand.u32 %s208, 1
          %s951 = scalar_lea.sflag [#allocation4], %s950
          %s952 = sand.u32 %s208, 1
          %s953 = smul.addr %s952, 16
          %s954 = scalar_lea.vmem [#allocation7], %s953
          %956 = dma.done %s951, 256
        $region72: #{tpu_custom_call.1} parent=67 // pred_fallthru
          _
      $region68: #{tpu_custom_call.1} parent=5 // pred_fallthru
        _
    $region6: #{tpu_custom_call.1} parent=1 // loop_footer
      %s25 = sadd.s32 1, %s21
    $region7: #{tpu_custom_call.1} parent=1 // loop_footer_branch
      %20 = sbr.rel target = $region3
    $region8: #{tpu_custom_call.1} parent=1 // loop_exit
      _
    %957 = vsyncpa [#allocation3], 1
    %s958 = scalar_lea.sflag [#allocation3], 1
    %959 = vsyncpa %s958, 1
    %960 = vsyncpa [#allocation6], 1
    %961 = vsyncpa [#allocation4], 1
    %s962 = scalar_lea.sflag [#allocation4], 1
    %963 = vsyncpa %s962, 1

</llo_original>
